<compile_context>
chip_gen: v7x
topology: tpu7x:2x2x1
jax: 0.10.0
libtpu: 0.0.40
codegen_flags: <defaults>
</compile_context>

<pallas_src>
import jax
import jax.numpy as jnp
import numpy as np
from jax.experimental import pallas as pl
from jax.experimental.pallas import tpu as pltpu

# ---------------- model hyper-parameters (match the PyTorch module) ----------
N_SKILL = 10
EMBED_DIM = 32
NUM_HEADS = 4
MAX_LEN = 64
SEQ_LEN = 8
BATCH = 2
LN_EPS = 1e-5

E = EMBED_DIM
H = NUM_HEADS
L = SEQ_LEN
B = BATCH
HD = E // H
T = B * L                 # 16 tokens per stream (q stream / qa stream)
C = B * H * L             # 64 stacked (batch, head, key-pos) columns
NT = (N_SKILL + 1) + (2 * N_SKILL + 2) + L   # 41 rows of combined embedding table
NT_PAD = 48
QA_OFF = N_SKILL + 1      # qa table offset inside the combined table
POS_OFF = QA_OFF + 2 * N_SKILL + 2           # positional rows offset (= 33)

# ---------------- packed constant-slab layout (width 128 lanes) --------------
R_WPACK = 0               # [E, 3E]   [Wq^T*scale | Wk^T | Wv^T]
R_WOUT = E                # [E, 3E]   [Wo^T | W1^T | W2^T]
R_BIAS = 2 * E            # 4 rows of packed bias / LN / pred vectors
R_TEMB = 2 * E + 8        # [NT_PAD, E] combined embedding table (q | qa | pos)
R_GONES = R_TEMB + NT_PAD          # [C, C]   block-diag ones per (batch, head)
R_HMASK = R_GONES + C              # [C, 2E]  per-head column mask (K half | V half)
R_AMASK = R_HMASK + C              # [T, C]   additive causal + same-batch mask
R_RSEL = R_AMASK + T               # [C, T]   key/value row replication selector
R_POSOH = R_RSEL + C               # [2T, NT_PAD] constant positional one-hot
R_TOTAL = R_POSOH + 2 * T          # 360 rows total
SLAB_W = 128


def _layernorm(x, g, b):
    # E[x^2] - E[x]^2 form: the two lane reductions are independent, so they can
    # dual-issue on the two XLU ports instead of chaining mu -> (x-mu)^2 -> mean.
    inv_e = 1.0 / x.shape[-1]
    mu = jnp.sum(x, axis=-1, keepdims=True) * inv_e
    ms = jnp.sum(x * x, axis=-1, keepdims=True) * inv_e
    var = ms - mu * mu
    return (x - mu) * jax.lax.rsqrt(var + LN_EPS) * g + b


def sakt_kernel(ids_ref, w_ref, o_ref):
    # ---- carve the single packed constant slab (one DMA, static slices) ----
    wpack = w_ref[R_WPACK:R_WPACK + E, 0:3 * E]          # [E, 3E]
    wo_t = w_ref[R_WOUT:R_WOUT + E, 0:E]                 # [E, E]
    w1_t = w_ref[R_WOUT:R_WOUT + E, E:2 * E]             # [E, E]
    w2_t = w_ref[R_WOUT:R_WOUT + E, 2 * E:3 * E]         # [E, E]
    b_in = w_ref[R_BIAS + 0:R_BIAS + 1, 0:3 * E]         # [1, 3E]  [bq*s | bk | bv]
    brow1 = w_ref[R_BIAS + 1:R_BIAS + 2, 0:3 * E]        # [1, 3E]  [bo | bf1 | bf2]
    bo, bf1, bf2 = brow1[:, 0:E], brow1[:, E:2 * E], brow1[:, 2 * E:3 * E]
    brow2 = w_ref[R_BIAS + 2:R_BIAS + 3, 0:3 * E]        # [1, 3E]  [g1 | be1 | g2]
    g1, be1, g2 = brow2[:, 0:E], brow2[:, E:2 * E], brow2[:, 2 * E:3 * E]
    brow3 = w_ref[R_BIAS + 3:R_BIAS + 4, 0:3 * E]        # [1, 3E]  [be2 | pred_w | pred_b...]
    be2, predw = brow3[:, 0:E], brow3[:, E:2 * E]
    predb = brow3[:, 2 * E:2 * E + 1]                    # [1, 1]
    t_emb = w_ref[R_TEMB:R_TEMB + NT_PAD, 0:E]           # [48, E]
    gones = w_ref[R_GONES:R_GONES + C, 0:C]              # [C, C]
    hmask2 = w_ref[R_HMASK:R_HMASK + C, 0:2 * E]         # [C, 2E]
    amask = w_ref[R_AMASK:R_AMASK + T, 0:C]              # [T, C]
    rsel = w_ref[R_RSEL:R_RSEL + C, 0:T]                 # [C, T]
    pos_oh = w_ref[R_POSOH:R_POSOH + 2 * T, 0:NT_PAD]    # [2T, 48]

    # ---- in-kernel embedding gather: one one-hot matmul (q | qa+pos) --------
    ids = ids_ref[...]                                              # [2T, 1] int32
    col = jax.lax.broadcasted_iota(jnp.int32, (2 * T, NT_PAD), 1)
    onehot = (ids == col).astype(jnp.float32) + pos_oh              # id hit + pos hit
    X = jnp.dot(onehot, t_emb, preferred_element_type=jnp.float32)  # [2T, E]
    Xq = X[0:T, :]                                                  # q embeddings (residual)

    # ---- fused Q/K/V in-projection: single [2T,E] x [E,3E] matmul -----------
    # rows 0:T are q tokens (only the Wq block is used), rows T:2T are qa tokens
    # (only the Wk|Wv blocks are used); the wasted quadrants are free.
    Z = jnp.dot(X, wpack, preferred_element_type=jnp.float32) + b_in   # [2T, 3E]
    Qs = Z[0:T, 0:E]              # queries, 1/sqrt(hd) scale folded into Wq^T/bq
    KV = Z[T:2 * T, E:3 * E]      # [T, 2E] = [K | V]

    # ---- stacked per-(batch, head) block-diagonal attention -----------------
    # KVbd row c=(b,h,j) holds K/V of (batch b, pos j) restricted to head h's
    # embedding columns -> one matmul per stage covers every batch and head.
    KVbd = jnp.dot(rsel, KV, preferred_element_type=jnp.float32) * hmask2  # [C, 2E]
    K_bd = KVbd[:, 0:E]
    V_bd = KVbd[:, E:2 * E]

    # scores: contract the last dims of both operands (MXU transposed-RHS path,
    # no explicit XLU transpose of K_bd); additive mask kills future positions
    # and cross-batch columns.
    S = jax.lax.dot_general(Qs, K_bd, (((1,), (1,)), ((), ())),
                            preferred_element_type=jnp.float32) + amask   # [T, C]

    # grouped softmax: a row-global max is shift-valid per group; fully masked
    # (cross-batch) groups give exp() == 0 exactly and the +1e-9 keeps their
    # reciprocal finite so p == 0 there.  Per-group denominators are recovered
    # with one block-diagonal-ones matmul (never mixes heads or batches).
    # Note: a per-(batch,head) max would be more robust for large weights.
    m = jnp.max(S, axis=-1, keepdims=True)
    e = jnp.exp(S - m)                                                    # [T, C]
    denom = jnp.dot(e, gones, preferred_element_type=jnp.float32) + 1e-9
    p = e * pl.reciprocal(denom, approx=True)

    # P @ V_bd re-concatenates heads along the embedding dim directly: [T, E]
    attn = jnp.dot(p, V_bd, preferred_element_type=jnp.float32)
    attn = jnp.dot(attn, wo_t, preferred_element_type=jnp.float32) + bo

    # ---- residual + LayerNorm1 ----------------------------------------------
    x = _layernorm(attn + Xq, g1, be1)

    # ---- FFN: Linear -> ReLU -> Linear (dropout = identity in eval) ---------
    h = jnp.maximum(jnp.dot(x, w1_t, preferred_element_type=jnp.float32) + bf1, 0.0)
    h = jnp.dot(h, w2_t, preferred_element_type=jnp.float32) + bf2

    # ---- residual + LayerNorm2 + folded prediction head ---------------------
    y = _layernorm(h + x, g2, be2)
    o_ref[...] = jnp.sum(y * predw, axis=-1, keepdims=True) + predb       # [T, 1]


def init_params(key):
    ks = jax.random.split(key, 13)
    nrm = lambda k, shape: 0.05 * jax.random.normal(k, shape, jnp.float32)
    P = {}
    P["q_embedding"] = nrm(ks[0], (N_SKILL + 1, E)).at[N_SKILL].set(0.0)           # padding_idx
    P["qa_embedding"] = nrm(ks[1], (2 * N_SKILL + 2, E)).at[2 * N_SKILL + 1].set(0.0)
    P["pos_embedding"] = nrm(ks[2], (MAX_LEN, E))
    P["in_proj_w"] = nrm(ks[3], (3 * E, E))
    P["in_proj_b"] = nrm(ks[4], (3 * E,))
    P["out_proj_w"] = nrm(ks[5], (E, E))
    P["out_proj_b"] = nrm(ks[6], (E,))
    P["ln1_g"] = jnp.ones((E,), jnp.float32)
    P["ln1_b"] = jnp.zeros((E,), jnp.float32)
    P["ffn_w1"] = nrm(ks[7], (E, E))
    P["ffn_b1"] = nrm(ks[8], (E,))
    P["ffn_w2"] = nrm(ks[9], (E, E))
    P["ffn_b2"] = nrm(ks[10], (E,))
    P["ln2_g"] = jnp.ones((E,), jnp.float32)
    P["ln2_b"] = jnp.zeros((E,), jnp.float32)
    P["pred_w"] = nrm(ks[11], (1, E))
    P["pred_b"] = nrm(ks[12], (1,))
    return P


def pack_constants(P):
    """Build the single [R_TOTAL, 128] constant slab.  Called ONCE at init."""
    scale = 1.0 / (float(HD) ** 0.5)
    wq, wk, wv = jnp.split(P["in_proj_w"], 3, axis=0)
    bq, bk, bv = jnp.split(P["in_proj_b"], 3)

    W = jnp.zeros((R_TOTAL, SLAB_W), jnp.float32)
    W = W.at[R_WPACK:R_WPACK + E, 0:3 * E].set(
        jnp.concatenate([wq.T * scale, wk.T, wv.T], axis=1))
    W = W.at[R_WOUT:R_WOUT + E, 0:3 * E].set(
        jnp.concatenate([P["out_proj_w"].T, P["ffn_w1"].T, P["ffn_w2"].T], axis=1))
    W = W.at[R_BIAS + 0, 0:3 * E].set(jnp.concatenate([bq * scale, bk, bv]))
    W = W.at[R_BIAS + 1, 0:3 * E].set(
        jnp.concatenate([P["out_proj_b"], P["ffn_b1"], P["ffn_b2"]]))
    W = W.at[R_BIAS + 2, 0:3 * E].set(
        jnp.concatenate([P["ln1_g"], P["ln1_b"], P["ln2_g"]]))
    W = W.at[R_BIAS + 3, 0:E].set(P["ln2_b"])
    W = W.at[R_BIAS + 3, E:2 * E].set(P["pred_w"][0])
    W = W.at[R_BIAS + 3, 2 * E].set(P["pred_b"][0])
    temb = jnp.concatenate(
        [P["q_embedding"], P["qa_embedding"], P["pos_embedding"][:L]], axis=0)
    W = W.at[R_TEMB:R_TEMB + NT, 0:E].set(temb)

    # ---- structural constants (exact 0/1 or additive-mask values) -----------
    c = np.arange(C)
    cb, ch, cj = c // (H * L), (c % (H * L)) // L, c % L          # batch / head / key pos
    r = np.arange(T)
    rb, ri = r // L, r % L                                        # batch / query pos
    gones = (c[:, None] // L == c[None, :] // L).astype(np.float32)               # [C, C]
    hmask = (ch[:, None] == (np.arange(E) // HD)[None, :]).astype(np.float32)     # [C, E]
    amask = np.where((rb[:, None] == cb[None, :]) & (cj[None, :] <= ri[:, None]),
                     0.0, -1e9).astype(np.float32)                                # [T, C]
    rsel = (r[None, :] == (cb * L + cj)[:, None]).astype(np.float32)              # [C, T]
    pos_oh = np.zeros((2 * T, NT_PAD), np.float32)
    pos_oh[np.arange(T, 2 * T), POS_OFF + (np.arange(T) % L)] = 1.0               # [2T, 48]

    W = W.at[R_GONES:R_GONES + C, 0:C].set(gones)
    W = W.at[R_HMASK:R_HMASK + C, 0:2 * E].set(np.concatenate([hmask, hmask], axis=1))
    W = W.at[R_AMASK:R_AMASK + T, 0:C].set(amask)
    W = W.at[R_RSEL:R_RSEL + C, 0:T].set(rsel)
    W = W.at[R_POSOH:R_POSOH + 2 * T, 0:NT_PAD].set(pos_oh)
    return W


@jax.jit
def sakt_forward_pallas(q_ids, qa_ids, consts):
    # Minimal wrapper glue (fused under jit): flatten ids into the token order
    # used inside the kernel (rows 0:T = q tokens, rows T:2T = qa tokens).
    tok_ids = jnp.concatenate(
        [q_ids.reshape(-1), qa_ids.reshape(-1) + QA_OFF]).astype(jnp.int32)[:, None]

    pred = pl.pallas_call(
        sakt_kernel,
        out_shape=jax.ShapeDtypeStruct((T, 1), jnp.float32),
        grid=(1,),
        in_specs=[
            pl.BlockSpec((2 * T, 1), lambda i: (0, 0)),
            pl.BlockSpec((R_TOTAL, SLAB_W), lambda i: (0, 0)),
        ],
        out_specs=pl.BlockSpec((T, 1), lambda i: (0, 0)),
        compiler_params=pltpu.CompilerParams(dimension_semantics=("arbitrary",)),
    )(tok_ids, consts)

    # [T, 1] -> [B, L] is a layout-preserving (free) reshape.
    return pred.reshape(BATCH, SEQ_LEN), None   # matches (x.squeeze(-1), None)


def sakt_forward_ref(q_ids, qa_ids, P):
    """Pure-JAX reference mirroring the PyTorch forward (eval mode)."""
    Bq, Lq = q_ids.shape
    hd = E // H
    q = jnp.take(P["q_embedding"], q_ids, axis=0)
    qa = jnp.take(P["qa_embedding"], qa_ids, axis=0) + P["pos_embedding"][:Lq][None]
    wq, wk, wv = jnp.split(P["in_proj_w"], 3, axis=0)
    bq, bk, bv = jnp.split(P["in_proj_b"], 3)
    Q = q @ wq.T + bq
    K = qa @ wk.T + bk
    V = qa @ wv.T + bv
    Qh = Q.reshape(Bq, Lq, H, hd).transpose(0, 2, 1, 3)
    Kh = K.reshape(Bq, Lq, H, hd).transpose(0, 2, 1, 3)
    Vh = V.reshape(Bq, Lq, H, hd).transpose(0, 2, 1, 3)
    s = jnp.einsum("bhqd,bhkd->bhqk", Qh, Kh) * (1.0 / (float(hd) ** 0.5))
    future = jnp.triu(jnp.ones((Lq, Lq), bool), 1)
    s = jnp.where(future, -1e30, s)
    p = jax.nn.softmax(s, axis=-1)
    o = jnp.einsum("bhqk,bhkd->bhqd", p, Vh).transpose(0, 2, 1, 3).reshape(Bq, Lq, E)
    o = o @ P["out_proj_w"].T + P["out_proj_b"]

    def ln(x, g, b):
        mu = x.mean(-1, keepdims=True)
        var = ((x - mu) ** 2).mean(-1, keepdims=True)
        return (x - mu) / jnp.sqrt(var + LN_EPS) * g + b

    x = ln(o + q, P["ln1_g"], P["ln1_b"])
    h = jnp.maximum(x @ P["ffn_w1"].T + P["ffn_b1"], 0.0) @ P["ffn_w2"].T + P["ffn_b2"]
    y = ln(h + x, P["ln2_g"], P["ln2_b"])
    return (y @ P["pred_w"].T + P["pred_b"])[..., 0]


if __name__ == "__main__":
    key = jax.random.PRNGKey(0)
    kp, kq, kqa = jax.random.split(key, 3)
    params = init_params(kp)
    consts = pack_constants(params)     # hoisted out of the per-call path (built once)

    q_ids = jax.random.randint(kq, (BATCH, SEQ_LEN), 0, N_SKILL, dtype=jnp.int32)
    qa_ids = jax.random.randint(kqa, (BATCH, SEQ_LEN), 0, 2 * N_SKILL, dtype=jnp.int32)

    out, _ = sakt_forward_pallas(q_ids, qa_ids, consts)
    out = jax.block_until_ready(out)

    ref = jax.block_until_ready(sakt_forward_ref(q_ids, qa_ids, params))
    assert out.shape == (BATCH, SEQ_LEN)
    assert jnp.allclose(out, ref, atol=2e-3, rtol=2e-3), (out, ref)
    print("KERNEL_OK")
</pallas_src>

<mosaic_0001>
module attributes {stable_mosaic.version = 11 : i64} {
  func.func @sakt_kernel(%arg0: i32, %arg1: memref<32x1xi32, #tpu.memory_space<vmem>>, %arg2: memref<360x128xf32, #tpu.memory_space<vmem>>, %arg3: memref<16x1xf32, #tpu.memory_space<vmem>>) attributes {dimension_semantics = [#tpu.dimension_semantics<arbitrary>], iteration_bounds = array<i64: 1>, scalar_prefetch = 0 : i64, scratch_operands = 0 : i64, tpu.core_type = #tpu.core_type<tc>, window_params = [{pipeline_mode = #tpu.pipeline_mode<synchronous>, transform_indices = @transform_0, window_bounds = array<i64: 32, 1>}, {pipeline_mode = #tpu.pipeline_mode<synchronous>, transform_indices = @transform_1, window_bounds = array<i64: 360, 128>}, {pipeline_mode = #tpu.pipeline_mode<synchronous>, transform_indices = @transform_2, window_bounds = array<i64: 16, 1>}]} {
    %c0 = arith.constant 0 : index
    %c0_0 = arith.constant 0 : index
    %0 = vector.load %arg2[%c0, %c0_0] : memref<360x128xf32, #tpu.memory_space<vmem>>, vector<32x96xf32>
    %c32 = arith.constant 32 : index
    %c0_1 = arith.constant 0 : index
    %1 = vector.load %arg2[%c32, %c0_1] : memref<360x128xf32, #tpu.memory_space<vmem>>, vector<32x32xf32>
    %c32_2 = arith.constant 32 : index
    %c32_3 = arith.constant 32 : index
    %2 = vector.load %arg2[%c32_2, %c32_3] : memref<360x128xf32, #tpu.memory_space<vmem>>, vector<32x32xf32>
    %c32_4 = arith.constant 32 : index
    %c64 = arith.constant 64 : index
    %3 = vector.load %arg2[%c32_4, %c64] : memref<360x128xf32, #tpu.memory_space<vmem>>, vector<32x32xf32>
    %c64_5 = arith.constant 64 : index
    %c0_6 = arith.constant 0 : index
    %4 = vector.load %arg2[%c64_5, %c0_6] : memref<360x128xf32, #tpu.memory_space<vmem>>, vector<1x96xf32>
    %c65 = arith.constant 65 : index
    %c0_7 = arith.constant 0 : index
    %5 = vector.load %arg2[%c65, %c0_7] : memref<360x128xf32, #tpu.memory_space<vmem>>, vector<1x96xf32>
    %6 = vector.extract_strided_slice %5 {offsets = [0, 0], sizes = [1, 32], strides = [1, 1]} : vector<1x96xf32> to vector<1x32xf32>
    %7 = vector.extract_strided_slice %5 {offsets = [0, 32], sizes = [1, 32], strides = [1, 1]} : vector<1x96xf32> to vector<1x32xf32>
    %8 = vector.extract_strided_slice %5 {offsets = [0, 64], sizes = [1, 32], strides = [1, 1]} : vector<1x96xf32> to vector<1x32xf32>
    %c66 = arith.constant 66 : index
    %c0_8 = arith.constant 0 : index
    %9 = vector.load %arg2[%c66, %c0_8] : memref<360x128xf32, #tpu.memory_space<vmem>>, vector<1x96xf32>
    %10 = vector.extract_strided_slice %9 {offsets = [0, 0], sizes = [1, 32], strides = [1, 1]} : vector<1x96xf32> to vector<1x32xf32>
    %11 = vector.extract_strided_slice %9 {offsets = [0, 32], sizes = [1, 32], strides = [1, 1]} : vector<1x96xf32> to vector<1x32xf32>
    %12 = vector.extract_strided_slice %9 {offsets = [0, 64], sizes = [1, 32], strides = [1, 1]} : vector<1x96xf32> to vector<1x32xf32>
    %c67 = arith.constant 67 : index
    %c0_9 = arith.constant 0 : index
    %13 = vector.load %arg2[%c67, %c0_9] : memref<360x128xf32, #tpu.memory_space<vmem>>, vector<1x96xf32>
    %14 = vector.extract_strided_slice %13 {offsets = [0, 0], sizes = [1, 32], strides = [1, 1]} : vector<1x96xf32> to vector<1x32xf32>
    %15 = vector.extract_strided_slice %13 {offsets = [0, 32], sizes = [1, 32], strides = [1, 1]} : vector<1x96xf32> to vector<1x32xf32>
    %16 = vector.extract_strided_slice %13 {offsets = [0, 64], sizes = [1, 1], strides = [1, 1]} : vector<1x96xf32> to vector<1x1xf32>
    %c72 = arith.constant 72 : index
    %c0_10 = arith.constant 0 : index
    %17 = vector.load %arg2[%c72, %c0_10] : memref<360x128xf32, #tpu.memory_space<vmem>>, vector<48x32xf32>
    %c120 = arith.constant 120 : index
    %c0_11 = arith.constant 0 : index
    %18 = vector.load %arg2[%c120, %c0_11] : memref<360x128xf32, #tpu.memory_space<vmem>>, vector<64x64xf32>
    %c184 = arith.constant 184 : index
    %c0_12 = arith.constant 0 : index
    %19 = vector.load %arg2[%c184, %c0_12] : memref<360x128xf32, #tpu.memory_space<vmem>>, vector<64x64xf32>
    %c248 = arith.constant 248 : index
    %c0_13 = arith.constant 0 : index
    %20 = vector.load %arg2[%c248, %c0_13] : memref<360x128xf32, #tpu.memory_space<vmem>>, vector<16x64xf32>
    %c264 = arith.constant 264 : index
    %c0_14 = arith.constant 0 : index
    %21 = vector.load %arg2[%c264, %c0_14] : memref<360x128xf32, #tpu.memory_space<vmem>>, vector<64x16xf32>
    %c328 = arith.constant 328 : index
    %c0_15 = arith.constant 0 : index
    %22 = vector.load %arg2[%c328, %c0_15] : memref<360x128xf32, #tpu.memory_space<vmem>>, vector<32x48xf32>
    %c0_16 = arith.constant 0 : index
    %c0_17 = arith.constant 0 : index
    %23 = vector.load %arg1[%c0_16, %c0_17] : memref<32x1xi32, #tpu.memory_space<vmem>>, vector<32x1xi32>
    %24 = tpu.iota {dimensions = array<i32: 1>} : vector<32x48xi32>
    %25 = vector.broadcast %23 : vector<32x1xi32> to vector<32x48xi32>
    %26 = arith.cmpi eq, %25, %24 : vector<32x48xi32>
    %27 = arith.extui %26 : vector<32x48xi1> to vector<32x48xi32>
    %28 = arith.sitofp %27 : vector<32x48xi32> to vector<32x48xf32>
    %29 = arith.addf %28, %22 : vector<32x48xf32>
    %cst = arith.constant dense<0.000000e+00> : vector<32x32xf32>
    %30 = tpu.matmul %29, %17, %cst {dimension_numbers = #tpu.dot_dimension_numbers<[1], [0], [0], [1], [0, 0, 1, 1], [], []>} : vector<32x48xf32>, vector<48x32xf32>, vector<32x32xf32> -> vector<32x32xf32>
    %31 = vector.extract_strided_slice %30 {offsets = [0, 0], sizes = [16, 32], strides = [1, 1]} : vector<32x32xf32> to vector<16x32xf32>
    %cst_18 = arith.constant dense<0.000000e+00> : vector<32x96xf32>
    %32 = tpu.matmul %30, %0, %cst_18 {dimension_numbers = #tpu.dot_dimension_numbers<[1], [0], [0], [1], [0, 0, 1, 1], [], []>} : vector<32x32xf32>, vector<32x96xf32>, vector<32x96xf32> -> vector<32x96xf32>
    %33 = vector.broadcast %4 : vector<1x96xf32> to vector<32x96xf32>
    %34 = arith.addf %32, %33 : vector<32x96xf32>
    %35 = vector.extract_strided_slice %34 {offsets = [0, 0], sizes = [16, 32], strides = [1, 1]} : vector<32x96xf32> to vector<16x32xf32>
    %36 = vector.extract_strided_slice %34 {offsets = [16, 32], sizes = [16, 64], strides = [1, 1]} : vector<32x96xf32> to vector<16x64xf32>
    %cst_19 = arith.constant dense<0.000000e+00> : vector<64x64xf32>
    %37 = tpu.matmul %21, %36, %cst_19 {dimension_numbers = #tpu.dot_dimension_numbers<[1], [0], [0], [1], [0, 0, 1, 1], [], []>} : vector<64x16xf32>, vector<16x64xf32>, vector<64x64xf32> -> vector<64x64xf32>
    %38 = arith.mulf %37, %19 : vector<64x64xf32>
    %39 = vector.extract_strided_slice %38 {offsets = [0, 0], sizes = [64, 32], strides = [1, 1]} : vector<64x64xf32> to vector<64x32xf32>
    %40 = vector.extract_strided_slice %38 {offsets = [0, 32], sizes = [64, 32], strides = [1, 1]} : vector<64x64xf32> to vector<64x32xf32>
    %cst_20 = arith.constant dense<0.000000e+00> : vector<16x64xf32>
    %41 = tpu.matmul %35, %39, %cst_20 {dimension_numbers = #tpu.dot_dimension_numbers<[1], [1], [0], [0], [0, 0, 1, 0], [], []>} : vector<16x32xf32>, vector<64x32xf32>, vector<16x64xf32> -> vector<16x64xf32>
    %42 = arith.addf %41, %20 : vector<16x64xf32>
    %cst_21 = arith.constant dense<0xFF800000> : vector<16xf32>
    %43 = vector.multi_reduction <maximumf>, %42, %cst_21 [1] : vector<16x64xf32> to vector<16xf32>
    %44 = vector.shape_cast %43 : vector<16xf32> to vector<16x1xf32>
    %45 = vector.broadcast %44 : vector<16x1xf32> to vector<16x64xf32>
    %46 = arith.subf %42, %45 : vector<16x64xf32>
    %47 = math.exp %46 : vector<16x64xf32>
    %cst_22 = arith.constant dense<0.000000e+00> : vector<16x64xf32>
    %48 = tpu.matmul %47, %18, %cst_22 {dimension_numbers = #tpu.dot_dimension_numbers<[1], [0], [0], [1], [0, 0, 1, 1], [], []>} : vector<16x64xf32>, vector<64x64xf32>, vector<16x64xf32> -> vector<16x64xf32>
    %cst_23 = arith.constant 9.99999971E-10 : f32
    %49 = vector.broadcast %cst_23 : f32 to vector<16x64xf32>
    %50 = arith.addf %48, %49 : vector<16x64xf32>
    %51 = tpu.reciprocal %50 {approx = true} : vector<16x64xf32> -> vector<16x64xf32>
    %52 = arith.mulf %47, %51 : vector<16x64xf32>
    %cst_24 = arith.constant dense<0.000000e+00> : vector<16x32xf32>
    %53 = tpu.matmul %52, %40, %cst_24 {dimension_numbers = #tpu.dot_dimension_numbers<[1], [0], [0], [1], [0, 0, 1, 1], [], []>} : vector<16x64xf32>, vector<64x32xf32>, vector<16x32xf32> -> vector<16x32xf32>
    %cst_25 = arith.constant dense<0.000000e+00> : vector<16x32xf32>
    %54 = tpu.matmul %53, %1, %cst_25 {dimension_numbers = #tpu.dot_dimension_numbers<[1], [0], [0], [1], [0, 0, 1, 1], [], []>} : vector<16x32xf32>, vector<32x32xf32>, vector<16x32xf32> -> vector<16x32xf32>
    %55 = vector.broadcast %6 : vector<1x32xf32> to vector<16x32xf32>
    %56 = arith.addf %54, %55 : vector<16x32xf32>
    %57 = arith.addf %56, %31 : vector<16x32xf32>
    %cst_26 = arith.constant dense<0.000000e+00> : vector<16xf32>
    %58 = vector.multi_reduction <add>, %57, %cst_26 [1] : vector<16x32xf32> to vector<16xf32>
    %59 = vector.shape_cast %58 : vector<16xf32> to vector<16x1xf32>
    %cst_27 = arith.constant 3.125000e-02 : f32
    %60 = vector.broadcast %cst_27 : f32 to vector<16x1xf32>
    %61 = arith.mulf %59, %60 : vector<16x1xf32>
    %62 = arith.mulf %57, %57 : vector<16x32xf32>
    %cst_28 = arith.constant dense<0.000000e+00> : vector<16xf32>
    %63 = vector.multi_reduction <add>, %62, %cst_28 [1] : vector<16x32xf32> to vector<16xf32>
    %64 = vector.shape_cast %63 : vector<16xf32> to vector<16x1xf32>
    %cst_29 = arith.constant 3.125000e-02 : f32
    %65 = vector.broadcast %cst_29 : f32 to vector<16x1xf32>
    %66 = arith.mulf %64, %65 : vector<16x1xf32>
    %67 = arith.mulf %61, %61 : vector<16x1xf32>
    %68 = arith.subf %66, %67 : vector<16x1xf32>
    %69 = vector.broadcast %61 : vector<16x1xf32> to vector<16x32xf32>
    %70 = arith.subf %57, %69 : vector<16x32xf32>
    %cst_30 = arith.constant 9.99999974E-6 : f32
    %71 = vector.broadcast %cst_30 : f32 to vector<16x1xf32>
    %72 = arith.addf %68, %71 : vector<16x1xf32>
    %73 = math.rsqrt %72 : vector<16x1xf32>
    %74 = vector.broadcast %73 : vector<16x1xf32> to vector<16x32xf32>
    %75 = arith.mulf %70, %74 : vector<16x32xf32>
    %76 = vector.broadcast %10 : vector<1x32xf32> to vector<16x32xf32>
    %77 = arith.mulf %75, %76 : vector<16x32xf32>
    %78 = vector.broadcast %11 : vector<1x32xf32> to vector<16x32xf32>
    %79 = arith.addf %77, %78 : vector<16x32xf32>
    %cst_31 = arith.constant dense<0.000000e+00> : vector<16x32xf32>
    %80 = tpu.matmul %79, %2, %cst_31 {dimension_numbers = #tpu.dot_dimension_numbers<[1], [0], [0], [1], [0, 0, 1, 1], [], []>} : vector<16x32xf32>, vector<32x32xf32>, vector<16x32xf32> -> vector<16x32xf32>
    %81 = vector.broadcast %7 : vector<1x32xf32> to vector<16x32xf32>
    %82 = arith.addf %80, %81 : vector<16x32xf32>
    %cst_32 = arith.constant 0.000000e+00 : f32
    %83 = vector.broadcast %cst_32 : f32 to vector<16x32xf32>
    %84 = arith.maximumf %82, %83 : vector<16x32xf32>
    %cst_33 = arith.constant dense<0.000000e+00> : vector<16x32xf32>
    %85 = tpu.matmul %84, %3, %cst_33 {dimension_numbers = #tpu.dot_dimension_numbers<[1], [0], [0], [1], [0, 0, 1, 1], [], []>} : vector<16x32xf32>, vector<32x32xf32>, vector<16x32xf32> -> vector<16x32xf32>
    %86 = vector.broadcast %8 : vector<1x32xf32> to vector<16x32xf32>
    %87 = arith.addf %85, %86 : vector<16x32xf32>
    %88 = arith.addf %87, %79 : vector<16x32xf32>
    %cst_34 = arith.constant dense<0.000000e+00> : vector<16xf32>
    %89 = vector.multi_reduction <add>, %88, %cst_34 [1] : vector<16x32xf32> to vector<16xf32>
    %90 = vector.shape_cast %89 : vector<16xf32> to vector<16x1xf32>
    %cst_35 = arith.constant 3.125000e-02 : f32
    %91 = vector.broadcast %cst_35 : f32 to vector<16x1xf32>
    %92 = arith.mulf %90, %91 : vector<16x1xf32>
    %93 = arith.mulf %88, %88 : vector<16x32xf32>
    %cst_36 = arith.constant dense<0.000000e+00> : vector<16xf32>
    %94 = vector.multi_reduction <add>, %93, %cst_36 [1] : vector<16x32xf32> to vector<16xf32>
    %95 = vector.shape_cast %94 : vector<16xf32> to vector<16x1xf32>
    %cst_37 = arith.constant 3.125000e-02 : f32
    %96 = vector.broadcast %cst_37 : f32 to vector<16x1xf32>
    %97 = arith.mulf %95, %96 : vector<16x1xf32>
    %98 = arith.mulf %92, %92 : vector<16x1xf32>
    %99 = arith.subf %97, %98 : vector<16x1xf32>
    %100 = vector.broadcast %92 : vector<16x1xf32> to vector<16x32xf32>
    %101 = arith.subf %88, %100 : vector<16x32xf32>
    %cst_38 = arith.constant 9.99999974E-6 : f32
    %102 = vector.broadcast %cst_38 : f32 to vector<16x1xf32>
    %103 = arith.addf %99, %102 : vector<16x1xf32>
    %104 = math.rsqrt %103 : vector<16x1xf32>
    %105 = vector.broadcast %104 : vector<16x1xf32> to vector<16x32xf32>
    %106 = arith.mulf %101, %105 : vector<16x32xf32>
    %107 = vector.broadcast %12 : vector<1x32xf32> to vector<16x32xf32>
    %108 = arith.mulf %106, %107 : vector<16x32xf32>
    %109 = vector.broadcast %14 : vector<1x32xf32> to vector<16x32xf32>
    %110 = arith.addf %108, %109 : vector<16x32xf32>
    %111 = vector.broadcast %15 : vector<1x32xf32> to vector<16x32xf32>
    %112 = arith.mulf %110, %111 : vector<16x32xf32>
    %cst_39 = arith.constant dense<0.000000e+00> : vector<16xf32>
    %113 = vector.multi_reduction <add>, %112, %cst_39 [1] : vector<16x32xf32> to vector<16xf32>
    %114 = vector.shape_cast %113 : vector<16xf32> to vector<16x1xf32>
    %115 = vector.broadcast %16 : vector<1x1xf32> to vector<16x1xf32>
    %116 = arith.addf %114, %115 : vector<16x1xf32>
    %c0_40 = arith.constant 0 : index
    %c0_41 = arith.constant 0 : index
    %117 = vector.load %arg3[%c0_40, %c0_41] : memref<16x1xf32, #tpu.memory_space<vmem>>, vector<16x1xf32>
    tpu.vector_store %arg3[%c0_40, %c0_41], %116 {strides = array<i32>} : memref<16x1xf32, #tpu.memory_space<vmem>>, vector<16x1xf32>,
    return
  }
  func.func @transform_0(%arg0: i32) -> (i32, i32) {
    %c0_i32 = arith.constant 0 : i32
    %c0_i32_0 = arith.constant 0 : i32
    %c0_i32_1 = arith.constant 0 : i32
    return %c0_i32, %c0_i32_0 : i32, i32
  }
  func.func @transform_1(%arg0: i32) -> (i32, i32) {
    %c0_i32 = arith.constant 0 : i32
    %c0_i32_0 = arith.constant 0 : i32
    %c0_i32_1 = arith.constant 0 : i32
    return %c0_i32, %c0_i32_0 : i32, i32
  }
  func.func @transform_2(%arg0: i32) -> (i32, i32) {
    %c0_i32 = arith.constant 0 : i32
    %c0_i32_0 = arith.constant 0 : i32
    %c0_i32_1 = arith.constant 0 : i32
    return %c0_i32, %c0_i32_0 : i32, i32
  }
}

</mosaic_0001>

<llo_original>
// kernel: sakt_forward_pallas.1
$region0: #{sakt_forward_pallas.1}
  #allocation0 [shape = 'u32[]', space=smem, size = 0x4, offset = 0x4, fixed_abs, tag = 'smem constant byte address 0x4 - core index']
  #allocation1 [shape = 'u32[144,128]{1,0:T(1,128)}', space=vmem, size = 0x12000, scoped, tag = 'internal scratch']
  %s0 = inlined_call_operand.vmem [shape: s32[32,1], index: 0, kind: input, shape index: {}]
  %s1 = inlined_call_operand.hbm [shape: f32[360,128], index: 1, kind: input, shape index: {}]
  %s2 = inlined_call_operand.vmem [shape: f32[16,1], index: 2, kind: output, shape index: {}]
  %s3 = sld [smem:[#allocation0]]
  $region22: #{sakt_forward_pallas.1} parent=0
    _
  %s5 = ssub.s32 1, %s3
  %s6 = scalar_select 0, %s5, %s3
  $region1: #{sakt_forward_pallas.1} parent=0
    #allocation2 [shape = 'u8[184320]{0}', space=vmem, size = 0x2d000, scoped, tag = 'input window, operand 1, single buffered']
    #allocation3 [shape = 's32[1]{0}', space=sflag, size = 0x4, scoped, tag = 'scoped memory for sakt_forward_pallas.1']
    %7 = vsyncpa [#allocation3], 0
    // Predicated region
    $region2: #{sakt_forward_pallas.1} parent=1 // pred_check
      _
    $region3: #{sakt_forward_pallas.1} parent=1 // pred_check_branch
      %9 = sbr.rel (0) target = $region5
    $region4: #{sakt_forward_pallas.1} parent=1 // pred_region
      _
    $region5: #{sakt_forward_pallas.1} parent=1 // pred_fallthru
      _
    // Predicated region
    $region6: #{sakt_forward_pallas.1} parent=1 // pred_check
      _
    $region7: #{sakt_forward_pallas.1} parent=1 // pred_check_branch
      %11 = sbr.rel (0) target = $region9
    $region8: #{sakt_forward_pallas.1} parent=1 // pred_region
      %s13 = ssub.s32 5760, 5760
      %14 = vsyncadd [#allocation3], %s13
      %s15 = sshll.u32 [#allocation2], 4
      %s16 = int_to_ptr.vmem [resolvable:$true] %s15
      %21 = dma.hbm_to_vmem [thread:$0]  %s1, 5760, %s16, [#allocation3], 128, 128, 8
    $region9: #{sakt_forward_pallas.1} parent=1 // pred_fallthru
      _
    // Predicated region
    $region10: #{sakt_forward_pallas.1} parent=1 // pred_check
      _
    $region11: #{sakt_forward_pallas.1} parent=1 // pred_check_branch
      %23 = sbr.rel (0) target = $region13
    $region12: #{sakt_forward_pallas.1} parent=1 // pred_region
      %24 = dma.done [#allocation3], 5760
    $region13: #{sakt_forward_pallas.1} parent=1 // pred_fallthru
      _
    %v25 = vld [vmem:[#allocation2] sm:$0xff]
    %v26 = vld [vmem:[#allocation2 + $0x8] sm:$0xff]
    %v27 = vld [vmem:[#allocation2 + $0x10] sm:$0xff]
    %v28 = vld [vmem:[#allocation2 + $0x18] sm:$0xff]
    %v29 = vld [vmem:[#allocation2 + $0x20] sm:$0xff]
    %v30 = vld [vmem:[#allocation2 + $0x28] sm:$0xff]
    %v31 = vld [vmem:[#allocation2 + $0x30] sm:$0xff]
    %v32 = vld [vmem:[#allocation2 + $0x38] sm:$0xff]
    %v33 = vld [vmem:[#allocation2 + $0x40] sm:$0x1]
    %v34 = vld [vmem:[#allocation2 + $0x41] sm:$0x1]
    %v35 = vld [vmem:[#allocation2 + $0x42] sm:$0x1]
    %v36 = vld [vmem:[#allocation2 + $0x43] sm:$0x1]
    %v37 = vld [vmem:[#allocation2 + $0x48] sm:$0xff]
    %v38 = vld [vmem:[#allocation2 + $0x50] sm:$0xff]
    %v39 = vld [vmem:[#allocation2 + $0x58] sm:$0xff]
    %v40 = vld [vmem:[#allocation2 + $0x60] sm:$0xff]
    %v41 = vld [vmem:[#allocation2 + $0x68] sm:$0xff]
    %v42 = vld [vmem:[#allocation2 + $0x70] sm:$0xff]
    %v43 = vld [vmem:[#allocation2 + $0x78] sm:$0xff]
    %v44 = vld [vmem:[#allocation2 + $0x80] sm:$0xff]
    %v45 = vld [vmem:[#allocation2 + $0x88] sm:$0xff]
    %v46 = vld [vmem:[#allocation2 + $0x90] sm:$0xff]
    %v47 = vld [vmem:[#allocation2 + $0x98] sm:$0xff]
    %v48 = vld [vmem:[#allocation2 + $0xa0] sm:$0xff]
    %v49 = vld [vmem:[#allocation2 + $0xa8] sm:$0xff]
    %v50 = vld [vmem:[#allocation2 + $0xb0] sm:$0xff]
    %v51 = vld [vmem:[#allocation2 + $0xb8] sm:$0xff]
    %v52 = vld [vmem:[#allocation2 + $0xc0] sm:$0xff]
    %v53 = vld [vmem:[#allocation2 + $0xc8] sm:$0xff]
    %v54 = vld [vmem:[#allocation2 + $0xd0] sm:$0xff]
    %v55 = vld [vmem:[#allocation2 + $0xd8] sm:$0xff]
    %v56 = vld [vmem:[#allocation2 + $0xe0] sm:$0xff]
    %v57 = vld [vmem:[#allocation2 + $0xe8] sm:$0xff]
    %v58 = vld [vmem:[#allocation2 + $0xf0] sm:$0xff]
    %v59 = vld [vmem:[#allocation2 + $0xf8] sm:$0xff]
    %v60 = vld [vmem:[#allocation2 + $0x100] sm:$0xff]
    %v61 = vld [vmem:[#allocation2 + $0x108] sm:$0xff]
    %v62 = vld [vmem:[#allocation2 + $0x110] sm:$0xff]
    %v63 = vld [vmem:[#allocation2 + $0x118] sm:$0xff]
    %v64 = vld [vmem:[#allocation2 + $0x120] sm:$0xff]
    %v65 = vld [vmem:[#allocation2 + $0x128] sm:$0xff]
    %v66 = vld [vmem:[#allocation2 + $0x130] sm:$0xff]
    %v67 = vld [vmem:[#allocation2 + $0x138] sm:$0xff]
    %v68 = vld [vmem:[#allocation2 + $0x140] sm:$0xff]
    %v69 = vld [vmem:[#allocation2 + $0x148] sm:$0xff]
    %v70 = vld [vmem:[#allocation2 + $0x150] sm:$0xff]
    %v71 = vld [vmem:[#allocation2 + $0x158] sm:$0xff]
    %v72 = vld [vmem:[#allocation2 + $0x160] sm:$0xff]
    %v73 = vld [vmem:[%s0] sm:$0xff]
    %v74 = vld [vmem:[%s0 + $0x8] sm:$0xff]
    %v75 = vld [vmem:[%s0 + $0x10] sm:$0xff]
    %v76 = vld [vmem:[%s0 + $0x18] sm:$0xff]
    %v77 = vlaneseq
    %v78 = vand.u32 %v77, 127
    %79 = vset.pattern.permute.xlu0 0
    %80 = vperm.xlu0 %79, %v73
    %v81 = vpop.permute.xlu0 %80
    %82 = vset.pattern.permute.xlu0 0
    %83 = vperm.xlu0 %82, %v74
    %v84 = vpop.permute.xlu0 %83
    %85 = vset.pattern.permute.xlu0 0
    %86 = vperm.xlu0 %85, %v75
    %v87 = vpop.permute.xlu0 %86
    %88 = vset.pattern.permute.xlu0 0
    %89 = vperm.xlu0 %88, %v76
    %v90 = vpop.permute.xlu0 %89
    %vm91 = vcmp.eq.s32.totalorder %v81, %v78
    %vm92 = vcmp.eq.s32.totalorder %v84, %v78
    %vm93 = vcmp.eq.s32.totalorder %v87, %v78
    %vm94 = vcmp.eq.s32.totalorder %v90, %v78
    %v95 = vsel %vm91, 1, 0
    %v96 = vsel %vm92, 1, 0
    %v97 = vsel %vm93, 1, 0
    %v98 = vsel %vm94, 1, 0
    %v99 = vcvt.s32.f32 %v95
    %v100 = vcvt.s32.f32 %v96
    %v101 = vcvt.s32.f32 %v97
    %v102 = vcvt.s32.f32 %v98
    %v103 = vadd.f32 %v99, %v69
    %v104 = vadd.f32 %v100, %v70
    %v105 = vadd.f32 %v101, %v71
    %v106 = vadd.f32 %v102, %v72
    %vm107 = vcmask 392192
    %v109 = vsel %vm107, %v103, 0
    %v112 = vsel %vm107, %v104, 0
    %v115 = vsel %vm107, %v105, 0
    %v118 = vsel %vm107, %v106, 0
    %120 = vmatprep.subr.mxu0 0.0
    %121 = vmatpush1.msra.mxu0 %v37
    %122 = vmatprep.subr.mxu0 0.0
    %123 = vmatpush1.msra.mxu0 %v38
    %124 = vmatprep.subr.mxu0 0.0
    %125 = vmatpush1.msra.mxu0 %v39
    %126 = vmatprep.subr.mxu0 0.0
    %127 = vmatpush1.msra.mxu0 %v40
    %128 = vmatprep.subr.mxu0 0.0
    %129 = vmatpush1.msra.mxu0 %v41
    %130 = vmatprep.subr.mxu0 0.0
    %131 = vmatpush1.msra.mxu0 %v42
    %132 = vmatprep.subr.mxu0 0.0
    %133 = vmatpush1.msra.mxu0 0.0
    %134 = vmatprep.subr.mxu0 0.0
    %135 = vmatpush1.msra.mxu0 0.0
    %136 = vmatprep.subr.mxu0 0.0
    %137 = vmatpush1.msra.mxu0 0.0
    %138 = vmatprep.subr.mxu0 0.0
    %139 = vmatpush1.msra.mxu0 0.0
    %140 = vmatprep.subr.mxu0 0.0
    %141 = vmatpush1.msra.mxu0 0.0
    %142 = vmatprep.subr.mxu0 0.0
    %143 = vmatpush1.msra.mxu0 0.0
    %144 = vmatprep.subr.mxu0 0.0
    %145 = vmatpush1.msra.mxu0 0.0
    %146 = vmatprep.subr.mxu0 0.0
    %147 = vmatpush1.msra.mxu0 0.0
    %148 = vmatprep.subr.mxu0 0.0
    %149 = vmatpush1.msra.mxu0 0.0
    %150 = vmatprep.subr.mxu0 0.0
    %151 = vmatpush1.msra.mxu0 0.0
    %152 = vmatprep.subr.mxu0 0.0
    %153 = vmatpush1.msra.mxu0 0.0
    %154 = vmatprep.subr.mxu0 0.0
    %155 = vmatpush1.msra.mxu0 0.0
    %156 = vmatprep.subr.mxu0 0.0
    %157 = vmatpush1.msra.mxu0 0.0
    %158 = vmatprep.subr.mxu0 0.0
    %159 = vmatpush1.msra.mxu0 0.0
    %160 = vmatprep.subr.mxu0 0.0
    %161 = vmatpush1.msra.mxu0 0.0
    %162 = vmatprep.subr.mxu0 0.0
    %163 = vmatpush1.msra.mxu0 0.0
    %164 = vmatprep.subr.mxu0 0.0
    %165 = vmatpush1.msra.mxu0 0.0
    %166 = vmatprep.subr.mxu0 0.0
    %167 = vmatpush1.msra.mxu0 0.0
    %168 = vmatprep.subr.mxu0 0.0
    %169 = vmatpush1.msra.mxu0 0.0
    %170 = vmatprep.subr.mxu0 0.0
    %171 = vmatpush1.msra.mxu0 0.0
    %172 = vmatprep.subr.mxu0 0.0
    %173 = vmatpush1.msra.mxu0 0.0
    %174 = vmatprep.subr.mxu0 0.0
    %175 = vmatpush1.msra.mxu0 0.0
    %176 = vmatprep.subr.mxu0 0.0
    %177 = vmatpush1.msra.mxu0 0.0
    %178 = vmatprep.subr.mxu0 0.0
    %179 = vmatpush1.msra.mxu0 0.0
    %180 = vmatprep.subr.mxu0 0.0
    %181 = vmatpush1.msra.mxu0 0.0
    %182 = vmatprep.subr.mxu0 0.0
    %183 = vmatpush1.msra.mxu0 0.0
    %184 = vmatprep.mubr.f32.mxu0 0.0
    %185 = vmatmul.mubr.f32.gmra.mrb[0].mxu0 %v109
    %v186 = vpop.f32.mrb[0].mxu0
    %v187 = vadd.f32 0.0, %v186
    %v188 = vpop.f32.mrb[0].mxu0
    %189 = vmatprep.mubr.f32.mxu0 0.0
    %190 = vmatmul.mubr.f32.gmra.mrb[0].mxu0 %v112
    %v191 = vpop.f32.mrb[0].mxu0
    %v192 = vadd.f32 0.0, %v191
    %v193 = vpop.f32.mrb[0].mxu0
    %194 = vmatprep.mubr.f32.mxu0 0.0
    %195 = vmatmul.mubr.f32.gmra.mrb[0].mxu0 %v115
    %v196 = vpop.f32.mrb[0].mxu0
    %v197 = vadd.f32 0.0, %v196
    %v198 = vpop.f32.mrb[0].mxu0
    %199 = vmatprep.mubr.f32.mxu0 0.0
    %200 = vmatmul.mubr.f32.gmra.mrb[0].mxu0 %v118
    %v201 = vpop.f32.mrb[0].mxu0
    %v202 = vadd.f32 0.0, %v201
    %v203 = vpop.f32.mrb[0].mxu0
    %204 = vdwg.mxu0
    %v205 = vlaneseq
    %v206 = vshrl.u32 %v205, 7
    %v207 = vsub.s32 0, %v206
    %v208 = vrot.slane %v33, %v207
    %vm209 = vcmask 261120
    %v211 = vsel %vm209, %v187, 0
    %v214 = vsel %vm209, %v192, 0
    %v217 = vsel %vm209, %v197, 0
    %v220 = vsel %vm209, %v202, 0
    %222 = vmatprep.subr.mxu0 0.0
    %223 = vmatpush1.msra.mxu0 %v25
    %224 = vmatprep.subr.mxu0 0.0
    %225 = vmatpush1.msra.mxu0 %v26
    %226 = vmatprep.subr.mxu0 0.0
    %227 = vmatpush1.msra.mxu0 %v27
    %228 = vmatprep.subr.mxu0 0.0
    %229 = vmatpush1.msra.mxu0 %v28
    %230 = vmatprep.subr.mxu0 0.0
    %231 = vmatpush1.msra.mxu0 0.0
    %232 = vmatprep.subr.mxu0 0.0
    %233 = vmatpush1.msra.mxu0 0.0
    %234 = vmatprep.subr.mxu0 0.0
    %235 = vmatpush1.msra.mxu0 0.0
    %236 = vmatprep.subr.mxu0 0.0
    %237 = vmatpush1.msra.mxu0 0.0
    %238 = vmatprep.subr.mxu0 0.0
    %239 = vmatpush1.msra.mxu0 0.0
    %240 = vmatprep.subr.mxu0 0.0
    %241 = vmatpush1.msra.mxu0 0.0
    %242 = vmatprep.subr.mxu0 0.0
    %243 = vmatpush1.msra.mxu0 0.0
    %244 = vmatprep.subr.mxu0 0.0
    %245 = vmatpush1.msra.mxu0 0.0
    %246 = vmatprep.subr.mxu0 0.0
    %247 = vmatpush1.msra.mxu0 0.0
    %248 = vmatprep.subr.mxu0 0.0
    %249 = vmatpush1.msra.mxu0 0.0
    %250 = vmatprep.subr.mxu0 0.0
    %251 = vmatpush1.msra.mxu0 0.0
    %252 = vmatprep.subr.mxu0 0.0
    %253 = vmatpush1.msra.mxu0 0.0
    %254 = vmatprep.subr.mxu0 0.0
    %255 = vmatpush1.msra.mxu0 0.0
    %256 = vmatprep.subr.mxu0 0.0
    %257 = vmatpush1.msra.mxu0 0.0
    %258 = vmatprep.subr.mxu0 0.0
    %259 = vmatpush1.msra.mxu0 0.0
    %260 = vmatprep.subr.mxu0 0.0
    %261 = vmatpush1.msra.mxu0 0.0
    %262 = vmatprep.subr.mxu0 0.0
    %263 = vmatpush1.msra.mxu0 0.0
    %264 = vmatprep.subr.mxu0 0.0
    %265 = vmatpush1.msra.mxu0 0.0
    %266 = vmatprep.subr.mxu0 0.0
    %267 = vmatpush1.msra.mxu0 0.0
    %268 = vmatprep.subr.mxu0 0.0
    %269 = vmatpush1.msra.mxu0 0.0
    %270 = vmatprep.subr.mxu0 0.0
    %271 = vmatpush1.msra.mxu0 0.0
    %272 = vmatprep.subr.mxu0 0.0
    %273 = vmatpush1.msra.mxu0 0.0
    %274 = vmatprep.subr.mxu0 0.0
    %275 = vmatpush1.msra.mxu0 0.0
    %276 = vmatprep.subr.mxu0 0.0
    %277 = vmatpush1.msra.mxu0 0.0
    %278 = vmatprep.subr.mxu0 0.0
    %279 = vmatpush1.msra.mxu0 0.0
    %280 = vmatprep.subr.mxu0 0.0
    %281 = vmatpush1.msra.mxu0 0.0
    %282 = vmatprep.subr.mxu0 0.0
    %283 = vmatpush1.msra.mxu0 0.0
    %284 = vmatprep.subr.mxu0 0.0
    %285 = vmatpush1.msra.mxu0 0.0
    %286 = vmatprep.mubr.f32.mxu0 0.0
    %287 = vmatmul.mubr.f32.gmra.mrb[0].mxu0 %v211
    %v288 = vpop.f32.mrb[0].mxu0
    %v289 = vadd.f32 %v208, %v288
    %v290 = vpop.f32.mrb[0].mxu0
    %291 = vmatprep.mubr.f32.mxu0 0.0
    %292 = vmatmul.mubr.f32.gmra.mrb[0].mxu0 %v214
    %v293 = vpop.f32.mrb[0].mxu0
    %v294 = vadd.f32 %v208, %v293
    %v295 = vpop.f32.mrb[0].mxu0
    %296 = vmatprep.mubr.f32.mxu0 0.0
    %297 = vmatmul.mubr.f32.gmra.mrb[0].mxu0 %v217
    %v298 = vpop.f32.mrb[0].mxu0
    %v299 = vadd.f32 %v208, %v298
    %v300 = vpop.f32.mrb[0].mxu0
    %301 = vmatprep.mubr.f32.mxu0 0.0
    %302 = vmatmul.mubr.f32.gmra.mrb[0].mxu0 %v220
    %v303 = vpop.f32.mrb[0].mxu0
    %v304 = vadd.f32 %v208, %v303
    %v305 = vpop.f32.mrb[0].mxu0
    %306 = vdwg.mxu0
    %309 = vrot.lane.b32.xlu0 %v299, 96
    %v310 = vpop.permute.xlu0 %309
    %311 = vrot.lane.b32.xlu0 %v304, 96
    %v312 = vpop.permute.xlu0 %311
    %vm315 = vcmask 130048
    %v317 = vsel %vm315, %v61, 0
    %v320 = vsel %vm315, %v62, 0
    %v323 = vsel %vm315, %v63, 0
    %v326 = vsel %vm315, %v64, 0
    %v329 = vsel %vm315, %v65, 0
    %v332 = vsel %vm315, %v66, 0
    %v335 = vsel %vm315, %v67, 0
    %v338 = vsel %vm315, %v68, 0
    %340 = vmatprep.subr.mxu0 0.0
    %341 = vmatpush1.msra.mxu0 %v310
    %342 = vmatprep.subr.mxu0 0.0
    %343 = vmatpush1.msra.mxu0 %v312
    %344 = vmatprep.subr.mxu0 0.0
    %345 = vmatpush1.msra.mxu0 0.0
    %346 = vmatprep.subr.mxu0 0.0
    %347 = vmatpush1.msra.mxu0 0.0
    %348 = vmatprep.subr.mxu0 0.0
    %349 = vmatpush1.msra.mxu0 0.0
    %350 = vmatprep.subr.mxu0 0.0
    %351 = vmatpush1.msra.mxu0 0.0
    %352 = vmatprep.subr.mxu0 0.0
    %353 = vmatpush1.msra.mxu0 0.0
    %354 = vmatprep.subr.mxu0 0.0
    %355 = vmatpush1.msra.mxu0 0.0
    %356 = vmatprep.subr.mxu0 0.0
    %357 = vmatpush1.msra.mxu0 0.0
    %358 = vmatprep.subr.mxu0 0.0
    %359 = vmatpush1.msra.mxu0 0.0
    %360 = vmatprep.subr.mxu0 0.0
    %361 = vmatpush1.msra.mxu0 0.0
    %362 = vmatprep.subr.mxu0 0.0
    %363 = vmatpush1.msra.mxu0 0.0
    %364 = vmatprep.subr.mxu0 0.0
    %365 = vmatpush1.msra.mxu0 0.0
    %366 = vmatprep.subr.mxu0 0.0
    %367 = vmatpush1.msra.mxu0 0.0
    %368 = vmatprep.subr.mxu0 0.0
    %369 = vmatpush1.msra.mxu0 0.0
    %370 = vmatprep.subr.mxu0 0.0
    %371 = vmatpush1.msra.mxu0 0.0
    %372 = vmatprep.subr.mxu0 0.0
    %373 = vmatpush1.msra.mxu0 0.0
    %374 = vmatprep.subr.mxu0 0.0
    %375 = vmatpush1.msra.mxu0 0.0
    %376 = vmatprep.subr.mxu0 0.0
    %377 = vmatpush1.msra.mxu0 0.0
    %378 = vmatprep.subr.mxu0 0.0
    %379 = vmatpush1.msra.mxu0 0.0
    %380 = vmatprep.subr.mxu0 0.0
    %381 = vmatpush1.msra.mxu0 0.0
    %382 = vmatprep.subr.mxu0 0.0
    %383 = vmatpush1.msra.mxu0 0.0
    %384 = vmatprep.subr.mxu0 0.0
    %385 = vmatpush1.msra.mxu0 0.0
    %386 = vmatprep.subr.mxu0 0.0
    %387 = vmatpush1.msra.mxu0 0.0
    %388 = vmatprep.subr.mxu0 0.0
    %389 = vmatpush1.msra.mxu0 0.0
    %390 = vmatprep.subr.mxu0 0.0
    %391 = vmatpush1.msra.mxu0 0.0
    %392 = vmatprep.subr.mxu0 0.0
    %393 = vmatpush1.msra.mxu0 0.0
    %394 = vmatprep.subr.mxu0 0.0
    %395 = vmatpush1.msra.mxu0 0.0
    %396 = vmatprep.subr.mxu0 0.0
    %397 = vmatpush1.msra.mxu0 0.0
    %398 = vmatprep.subr.mxu0 0.0
    %399 = vmatpush1.msra.mxu0 0.0
    %400 = vmatprep.subr.mxu0 0.0
    %401 = vmatpush1.msra.mxu0 0.0
    %402 = vmatprep.subr.mxu0 0.0
    %403 = vmatpush1.msra.mxu0 0.0
    %404 = vmatprep.mubr.f32.mxu0 0.0
    %405 = vmatmul.mubr.f32.gmra.mrb[0].mxu0 %v317
    %v406 = vpop.f32.mrb[0].mxu0
    %v407 = vadd.f32 0.0, %v406
    %v408 = vpop.f32.mrb[0].mxu0
    %409 = vmatprep.mubr.f32.mxu0 0.0
    %410 = vmatmul.mubr.f32.gmra.mrb[0].mxu0 %v320
    %v411 = vpop.f32.mrb[0].mxu0
    %v412 = vadd.f32 0.0, %v411
    %v413 = vpop.f32.mrb[0].mxu0
    %414 = vmatprep.mubr.f32.mxu0 0.0
    %415 = vmatmul.mubr.f32.gmra.mrb[0].mxu0 %v323
    %v416 = vpop.f32.mrb[0].mxu0
    %v417 = vadd.f32 0.0, %v416
    %v418 = vpop.f32.mrb[0].mxu0
    %419 = vmatprep.mubr.f32.mxu0 0.0
    %420 = vmatmul.mubr.f32.gmra.mrb[0].mxu0 %v326
    %v421 = vpop.f32.mrb[0].mxu0
    %v422 = vadd.f32 0.0, %v421
    %v423 = vpop.f32.mrb[0].mxu0
    %424 = vmatprep.mubr.f32.mxu0 0.0
    %425 = vmatmul.mubr.f32.gmra.mrb[0].mxu0 %v329
    %v426 = vpop.f32.mrb[0].mxu0
    %v427 = vadd.f32 0.0, %v426
    %v428 = vpop.f32.mrb[0].mxu0
    %429 = vmatprep.mubr.f32.mxu0 0.0
    %430 = vmatmul.mubr.f32.gmra.mrb[0].mxu0 %v332
    %v431 = vpop.f32.mrb[0].mxu0
    %v432 = vadd.f32 0.0, %v431
    %v433 = vpop.f32.mrb[0].mxu0
    %434 = vmatprep.mubr.f32.mxu0 0.0
    %435 = vmatmul.mubr.f32.gmra.mrb[0].mxu0 %v335
    %v436 = vpop.f32.mrb[0].mxu0
    %v437 = vadd.f32 0.0, %v436
    %v438 = vpop.f32.mrb[0].mxu0
    %439 = vmatprep.mubr.f32.mxu0 0.0
    %440 = vmatmul.mubr.f32.gmra.mrb[0].mxu0 %v338
    %v441 = vpop.f32.mrb[0].mxu0
    %v442 = vadd.f32 0.0, %v441
    %v443 = vpop.f32.mrb[0].mxu0
    %444 = vdwg.mxu0
    %v445 = vmul.f32 %v407, %v51
    %v446 = vmul.f32 %v412, %v52
    %v447 = vmul.f32 %v417, %v53
    %v448 = vmul.f32 %v422, %v54
    %v449 = vmul.f32 %v427, %v55
    %v450 = vmul.f32 %v432, %v56
    %v451 = vmul.f32 %v437, %v57
    %v452 = vmul.f32 %v442, %v58
    %v454 = vsel %vm209, %v289, 0
    %v457 = vsel %vm209, %v294, 0
    %v460 = vsel %vm209, %v445, 0
    %v463 = vsel %vm209, %v446, 0
    %v466 = vsel %vm209, %v447, 0
    %v469 = vsel %vm209, %v448, 0
    %v472 = vsel %vm209, %v449, 0
    %v475 = vsel %vm209, %v450, 0
    %v478 = vsel %vm209, %v451, 0
    %v481 = vsel %vm209, %v452, 0
    %483 = vmatprep.subr.mxu0 0.0
    %484 = vmatpush1.xpose.msra.mxu0 %v460
    %485 = vmatprep.subr.mxu0 0.0
    %486 = vmatpush1.xpose.msra.mxu0 %v463
    %487 = vmatprep.subr.mxu0 0.0
    %488 = vmatpush1.xpose.msra.mxu0 %v466
    %489 = vmatprep.subr.mxu0 0.0
    %490 = vmatpush1.xpose.msra.mxu0 %v469
    %491 = vmatprep.subr.mxu0 0.0
    %492 = vmatpush1.xpose.msra.mxu0 %v472
    %493 = vmatprep.subr.mxu0 0.0
    %494 = vmatpush1.xpose.msra.mxu0 %v475
    %495 = vmatprep.subr.mxu0 0.0
    %496 = vmatpush1.xpose.msra.mxu0 %v478
    %497 = vmatprep.subr.mxu0 0.0
    %498 = vmatpush1.xpose.msra.mxu0 %v481
    %499 = vmatprep.subr.mxu0 0.0
    %500 = vmatpush1.xpose.msra.mxu0 0.0
    %501 = vmatprep.subr.mxu0 0.0
    %502 = vmatpush1.xpose.msra.mxu0 0.0
    %503 = vmatprep.subr.mxu0 0.0
    %504 = vmatpush1.xpose.msra.mxu0 0.0
    %505 = vmatprep.subr.mxu0 0.0
    %506 = vmatpush1.xpose.msra.mxu0 0.0
    %507 = vmatprep.subr.mxu0 0.0
    %508 = vmatpush1.xpose.msra.mxu0 0.0
    %509 = vmatprep.subr.mxu0 0.0
    %510 = vmatpush1.xpose.msra.mxu0 0.0
    %511 = vmatprep.subr.mxu0 0.0
    %512 = vmatpush1.xpose.msra.mxu0 0.0
    %513 = vmatprep.subr.mxu0 0.0
    %514 = vmatpush1.xpose.msra.mxu0 0.0
    %515 = vmatprep.subr.mxu0 0.0
    %516 = vmatpush1.xpose.msra.mxu0 0.0
    %517 = vmatprep.subr.mxu0 0.0
    %518 = vmatpush1.xpose.msra.mxu0 0.0
    %519 = vmatprep.subr.mxu0 0.0
    %520 = vmatpush1.xpose.msra.mxu0 0.0
    %521 = vmatprep.subr.mxu0 0.0
    %522 = vmatpush1.xpose.msra.mxu0 0.0
    %523 = vmatprep.subr.mxu0 0.0
    %524 = vmatpush1.xpose.msra.mxu0 0.0
    %525 = vmatprep.subr.mxu0 0.0
    %526 = vmatpush1.xpose.msra.mxu0 0.0
    %527 = vmatprep.subr.mxu0 0.0
    %528 = vmatpush1.xpose.msra.mxu0 0.0
    %529 = vmatprep.subr.mxu0 0.0
    %530 = vmatpush1.xpose.msra.mxu0 0.0
    %531 = vmatprep.subr.mxu0 0.0
    %532 = vmatpush1.xpose.msra.mxu0 0.0
    %533 = vmatprep.subr.mxu0 0.0
    %534 = vmatpush1.xpose.msra.mxu0 0.0
    %535 = vmatprep.subr.mxu0 0.0
    %536 = vmatpush1.xpose.msra.mxu0 0.0
    %537 = vmatprep.subr.mxu0 0.0
    %538 = vmatpush1.xpose.msra.mxu0 0.0
    %539 = vmatprep.subr.mxu0 0.0
    %540 = vmatpush1.xpose.msra.mxu0 0.0
    %541 = vmatprep.subr.mxu0 0.0
    %542 = vmatpush1.xpose.msra.mxu0 0.0
    %543 = vmatprep.subr.mxu0 0.0
    %544 = vmatpush1.xpose.msra.mxu0 0.0
    %545 = vmatprep.subr.mxu0 0.0
    %546 = vmatpush1.xpose.msra.mxu0 0.0
    %547 = vmatprep.mubr.f32.mxu0 0.0
    %548 = vmatmul.mubr.f32.gmra.mrb[0].mxu0 %v454
    %v549 = vpop.f32.mrb[0].mxu0
    %v550 = vadd.f32 %v59, %v549
    %v551 = vpop.f32.mrb[0].mxu0
    %552 = vmatprep.mubr.f32.mxu0 0.0
    %553 = vmatmul.mubr.f32.gmra.mrb[0].mxu0 %v457
    %v554 = vpop.f32.mrb[0].mxu0
    %v555 = vadd.f32 %v60, %v554
    %v556 = vpop.f32.mrb[0].mxu0
    %557 = vdwg.mxu0
    %vm558 = vcmask 523264
    %v559 = vsel %vm558, %v550, -inf
    %560 = vmax.xlane.f32.xlu0 %v559
    %v561 = vpop.xlane.xlu0 %560
    %v562 = vsel %vm558, %v555, -inf
    %563 = vmax.xlane.f32.xlu0 %v562
    %v564 = vpop.xlane.xlu0 %563
    %v565 = vsub.f32 %v550, %v561
    %v566 = vsub.f32 %v555, %v564
    %v567 = vmul.f32 %v565, 1.442695
    %v568 = vpow.pop %v567
    %v569 = vmul.f32 %v566, 1.442695
    %v570 = vpow.pop %v569
    %v572 = vsel %vm558, %v568, 0
    %v575 = vsel %vm558, %v570, 0
    %577 = vmatprep.subr.mxu0 0.0
    %578 = vmatpush1.msra.mxu0 %v43
    %579 = vmatprep.subr.mxu0 0.0
    %580 = vmatpush1.msra.mxu0 %v44
    %581 = vmatprep.subr.mxu0 0.0
    %582 = vmatpush1.msra.mxu0 %v45
    %583 = vmatprep.subr.mxu0 0.0
    %584 = vmatpush1.msra.mxu0 %v46
    %585 = vmatprep.subr.mxu0 0.0
    %586 = vmatpush1.msra.mxu0 %v47
    %587 = vmatprep.subr.mxu0 0.0
    %588 = vmatpush1.msra.mxu0 %v48
    %589 = vmatprep.subr.mxu0 0.0
    %590 = vmatpush1.msra.mxu0 %v49
    %591 = vmatprep.subr.mxu0 0.0
    %592 = vmatpush1.msra.mxu0 %v50
    %593 = vmatprep.subr.mxu0 0.0
    %594 = vmatpush1.msra.mxu0 0.0
    %595 = vmatprep.subr.mxu0 0.0
    %596 = vmatpush1.msra.mxu0 0.0
    %597 = vmatprep.subr.mxu0 0.0
    %598 = vmatpush1.msra.mxu0 0.0
    %599 = vmatprep.subr.mxu0 0.0
    %600 = vmatpush1.msra.mxu0 0.0
    %601 = vmatprep.subr.mxu0 0.0
    %602 = vmatpush1.msra.mxu0 0.0
    %603 = vmatprep.subr.mxu0 0.0
    %604 = vmatpush1.msra.mxu0 0.0
    %605 = vmatprep.subr.mxu0 0.0
    %606 = vmatpush1.msra.mxu0 0.0
    %607 = vmatprep.subr.mxu0 0.0
    %608 = vmatpush1.msra.mxu0 0.0
    %609 = vmatprep.subr.mxu0 0.0
    %610 = vmatpush1.msra.mxu0 0.0
    %611 = vmatprep.subr.mxu0 0.0
    %612 = vmatpush1.msra.mxu0 0.0
    %613 = vmatprep.subr.mxu0 0.0
    %614 = vmatpush1.msra.mxu0 0.0
    %615 = vmatprep.subr.mxu0 0.0
    %616 = vmatpush1.msra.mxu0 0.0
    %617 = vmatprep.subr.mxu0 0.0
    %618 = vmatpush1.msra.mxu0 0.0
    %619 = vmatprep.subr.mxu0 0.0
    %620 = vmatpush1.msra.mxu0 0.0
    %621 = vmatprep.subr.mxu0 0.0
    %622 = vmatpush1.msra.mxu0 0.0
    %623 = vmatprep.subr.mxu0 0.0
    %624 = vmatpush1.msra.mxu0 0.0
    %625 = vmatprep.subr.mxu0 0.0
    %626 = vmatpush1.msra.mxu0 0.0
    %627 = vmatprep.subr.mxu0 0.0
    %628 = vmatpush1.msra.mxu0 0.0
    %629 = vmatprep.subr.mxu0 0.0
    %630 = vmatpush1.msra.mxu0 0.0
    %631 = vmatprep.subr.mxu0 0.0
    %632 = vmatpush1.msra.mxu0 0.0
    %633 = vmatprep.subr.mxu0 0.0
    %634 = vmatpush1.msra.mxu0 0.0
    %635 = vmatprep.subr.mxu0 0.0
    %636 = vmatpush1.msra.mxu0 0.0
    %637 = vmatprep.subr.mxu0 0.0
    %638 = vmatpush1.msra.mxu0 0.0
    %639 = vmatprep.subr.mxu0 0.0
    %640 = vmatpush1.msra.mxu0 0.0
    %641 = vmatprep.mubr.f32.mxu0 0.0
    %642 = vmatmul.mubr.f32.gmra.mrb[0].mxu0 %v572
    %v643 = vpop.f32.mrb[0].mxu0
    %v644 = vadd.f32 1e-09, %v643
    %v645 = vpop.f32.mrb[0].mxu0
    %646 = vmatprep.mubr.f32.mxu0 0.0
    %647 = vmatmul.mubr.f32.gmra.mrb[0].mxu0 %v575
    %v648 = vpop.f32.mrb[0].mxu0
    %v649 = vadd.f32 1e-09, %v648
    %v650 = vpop.f32.mrb[0].mxu0
    %651 = vdwg.mxu0
    %v652 = vrcp.pop %v644
    %v653 = vrcp.pop %v649
    %v654 = vmul.f32 %v568, %v652
    %v655 = vmul.f32 %v570, %v653
    %656 = vrot.lane.b32.xlu0 %v445, 96
    %v657 = vpop.permute.xlu0 %656
    %658 = vrot.lane.b32.xlu0 %v446, 96
    %v659 = vpop.permute.xlu0 %658
    %660 = vrot.lane.b32.xlu0 %v447, 96
    %v661 = vpop.permute.xlu0 %660
    %662 = vrot.lane.b32.xlu0 %v448, 96
    %v663 = vpop.permute.xlu0 %662
    %664 = vrot.lane.b32.xlu0 %v449, 96
    %v665 = vpop.permute.xlu0 %664
    %666 = vrot.lane.b32.xlu0 %v450, 96
    %v667 = vpop.permute.xlu0 %666
    %668 = vrot.lane.b32.xlu0 %v451, 96
    %v669 = vpop.permute.xlu0 %668
    %670 = vrot.lane.b32.xlu0 %v452, 96
    %v671 = vpop.permute.xlu0 %670
    %v681 = vsel %vm558, %v654, 0
    %v684 = vsel %vm558, %v655, 0
    %686 = vmatprep.subr.mxu0 0.0
    %687 = vmatpush1.msra.mxu0 %v657
    %688 = vmatprep.subr.mxu0 0.0
    %689 = vmatpush1.msra.mxu0 %v659
    %690 = vmatprep.subr.mxu0 0.0
    %691 = vmatpush1.msra.mxu0 %v661
    %692 = vmatprep.subr.mxu0 0.0
    %693 = vmatpush1.msra.mxu0 %v663
    %694 = vmatprep.subr.mxu0 0.0
    %695 = vmatpush1.msra.mxu0 %v665
    %696 = vmatprep.subr.mxu0 0.0
    %697 = vmatpush1.msra.mxu0 %v667
    %698 = vmatprep.subr.mxu0 0.0
    %699 = vmatpush1.msra.mxu0 %v669
    %700 = vmatprep.subr.mxu0 0.0
    %701 = vmatpush1.msra.mxu0 %v671
    %702 = vmatprep.subr.mxu0 0.0
    %703 = vmatpush1.msra.mxu0 0.0
    %704 = vmatprep.subr.mxu0 0.0
    %705 = vmatpush1.msra.mxu0 0.0
    %706 = vmatprep.subr.mxu0 0.0
    %707 = vmatpush1.msra.mxu0 0.0
    %708 = vmatprep.subr.mxu0 0.0
    %709 = vmatpush1.msra.mxu0 0.0
    %710 = vmatprep.subr.mxu0 0.0
    %711 = vmatpush1.msra.mxu0 0.0
    %712 = vmatprep.subr.mxu0 0.0
    %713 = vmatpush1.msra.mxu0 0.0
    %714 = vmatprep.subr.mxu0 0.0
    %715 = vmatpush1.msra.mxu0 0.0
    %716 = vmatprep.subr.mxu0 0.0
    %717 = vmatpush1.msra.mxu0 0.0
    %718 = vmatprep.subr.mxu0 0.0
    %719 = vmatpush1.msra.mxu0 0.0
    %720 = vmatprep.subr.mxu0 0.0
    %721 = vmatpush1.msra.mxu0 0.0
    %722 = vmatprep.subr.mxu0 0.0
    %723 = vmatpush1.msra.mxu0 0.0
    %724 = vmatprep.subr.mxu0 0.0
    %725 = vmatpush1.msra.mxu0 0.0
    %726 = vmatprep.subr.mxu0 0.0
    %727 = vmatpush1.msra.mxu0 0.0
    %728 = vmatprep.subr.mxu0 0.0
    %729 = vmatpush1.msra.mxu0 0.0
    %730 = vmatprep.subr.mxu0 0.0
    %731 = vmatpush1.msra.mxu0 0.0
    %732 = vmatprep.subr.mxu0 0.0
    %733 = vmatpush1.msra.mxu0 0.0
    %734 = vmatprep.subr.mxu0 0.0
    %735 = vmatpush1.msra.mxu0 0.0
    %736 = vmatprep.subr.mxu0 0.0
    %737 = vmatpush1.msra.mxu0 0.0
    %738 = vmatprep.subr.mxu0 0.0
    %739 = vmatpush1.msra.mxu0 0.0
    %740 = vmatprep.subr.mxu0 0.0
    %741 = vmatpush1.msra.mxu0 0.0
    %742 = vmatprep.subr.mxu0 0.0
    %743 = vmatpush1.msra.mxu0 0.0
    %744 = vmatprep.subr.mxu0 0.0
    %745 = vmatpush1.msra.mxu0 0.0
    %746 = vmatprep.subr.mxu0 0.0
    %747 = vmatpush1.msra.mxu0 0.0
    %748 = vmatprep.subr.mxu0 0.0
    %749 = vmatpush1.msra.mxu0 0.0
    %750 = vmatprep.mubr.f32.mxu0 0.0
    %751 = vmatmul.mubr.f32.gmra.mrb[0].mxu0 %v681
    %v752 = vpop.f32.mrb[0].mxu0
    %v753 = vadd.f32 0.0, %v752
    %v754 = vpop.f32.mrb[0].mxu0
    %755 = vmatprep.mubr.f32.mxu0 0.0
    %756 = vmatmul.mubr.f32.gmra.mrb[0].mxu0 %v684
    %v757 = vpop.f32.mrb[0].mxu0
    %v758 = vadd.f32 0.0, %v757
    %v759 = vpop.f32.mrb[0].mxu0
    %760 = vdwg.mxu0
    %v761 = vlaneseq
    %v762 = vshrl.u32 %v761, 7
    %v763 = vsub.s32 0, %v762
    %v764 = vrot.slane %v34, %v763
    %v766 = vsel %vm209, %v753, 0
    %v769 = vsel %vm209, %v758, 0
    %771 = vmatprep.subr.mxu0 0.0
    %772 = vmatpush1.msra.mxu0 %v29
    %773 = vmatprep.subr.mxu0 0.0
    %774 = vmatpush1.msra.mxu0 %v30
    %775 = vmatprep.subr.mxu0 0.0
    %776 = vmatpush1.msra.mxu0 %v31
    %777 = vmatprep.subr.mxu0 0.0
    %778 = vmatpush1.msra.mxu0 %v32
    %779 = vmatprep.subr.mxu0 0.0
    %780 = vmatpush1.msra.mxu0 0.0
    %781 = vmatprep.subr.mxu0 0.0
    %782 = vmatpush1.msra.mxu0 0.0
    %783 = vmatprep.subr.mxu0 0.0
    %784 = vmatpush1.msra.mxu0 0.0
    %785 = vmatprep.subr.mxu0 0.0
    %786 = vmatpush1.msra.mxu0 0.0
    %787 = vmatprep.subr.mxu0 0.0
    %788 = vmatpush1.msra.mxu0 0.0
    %789 = vmatprep.subr.mxu0 0.0
    %790 = vmatpush1.msra.mxu0 0.0
    %791 = vmatprep.subr.mxu0 0.0
    %792 = vmatpush1.msra.mxu0 0.0
    %793 = vmatprep.subr.mxu0 0.0
    %794 = vmatpush1.msra.mxu0 0.0
    %795 = vmatprep.subr.mxu0 0.0
    %796 = vmatpush1.msra.mxu0 0.0
    %797 = vmatprep.subr.mxu0 0.0
    %798 = vmatpush1.msra.mxu0 0.0
    %799 = vmatprep.subr.mxu0 0.0
    %800 = vmatpush1.msra.mxu0 0.0
    %801 = vmatprep.subr.mxu0 0.0
    %802 = vmatpush1.msra.mxu0 0.0
    %803 = vmatprep.subr.mxu0 0.0
    %804 = vmatpush1.msra.mxu0 0.0
    %805 = vmatprep.subr.mxu0 0.0
    %806 = vmatpush1.msra.mxu0 0.0
    %807 = vmatprep.subr.mxu0 0.0
    %808 = vmatpush1.msra.mxu0 0.0
    %809 = vmatprep.subr.mxu0 0.0
    %810 = vmatpush1.msra.mxu0 0.0
    %811 = vmatprep.subr.mxu0 0.0
    %812 = vmatpush1.msra.mxu0 0.0
    %813 = vmatprep.subr.mxu0 0.0
    %814 = vmatpush1.msra.mxu0 0.0
    %815 = vmatprep.subr.mxu0 0.0
    %816 = vmatpush1.msra.mxu0 0.0
    %817 = vmatprep.subr.mxu0 0.0
    %818 = vmatpush1.msra.mxu0 0.0
    %819 = vmatprep.subr.mxu0 0.0
    %820 = vmatpush1.msra.mxu0 0.0
    %821 = vmatprep.subr.mxu0 0.0
    %822 = vmatpush1.msra.mxu0 0.0
    %823 = vmatprep.subr.mxu0 0.0
    %824 = vmatpush1.msra.mxu0 0.0
    %825 = vmatprep.subr.mxu0 0.0
    %826 = vmatpush1.msra.mxu0 0.0
    %827 = vmatprep.subr.mxu0 0.0
    %828 = vmatpush1.msra.mxu0 0.0
    %829 = vmatprep.subr.mxu0 0.0
    %830 = vmatpush1.msra.mxu0 0.0
    %831 = vmatprep.subr.mxu0 0.0
    %832 = vmatpush1.msra.mxu0 0.0
    %833 = vmatprep.subr.mxu0 0.0
    %834 = vmatpush1.msra.mxu0 0.0
    %835 = vmatprep.mubr.f32.mxu0 0.0
    %836 = vmatmul.mubr.f32.gmra.mrb[0].mxu0 %v766
    %v837 = vpop.f32.mrb[0].mxu0
    %v838 = vadd.f32 %v764, %v837
    %v839 = vpop.f32.mrb[0].mxu0
    %840 = vmatprep.mubr.f32.mxu0 0.0
    %841 = vmatmul.mubr.f32.gmra.mrb[0].mxu0 %v769
    %v842 = vpop.f32.mrb[0].mxu0
    %v843 = vadd.f32 %v764, %v842
    %v844 = vpop.f32.mrb[0].mxu0
    %845 = vdwg.mxu0
    %v846 = vadd.f32 %v838, %v187
    %v847 = vadd.f32 %v843, %v192
    %v848 = vsel %vm209, %v846, 0.0
    %849 = vadd.xlane.f32.xlu0 %v848
    %v850 = vpop.xlane.xlu0 %849
    %v851 = vsel %vm209, %v847, 0.0
    %852 = vadd.xlane.f32.xlu0 %v851
    %v853 = vpop.xlane.xlu0 %852
    %v854 = vmul.f32 %v850, 0.03125
    %v855 = vmul.f32 %v853, 0.03125
    %v856 = vmul.f32 %v846, %v846
    %v857 = vmul.f32 %v847, %v847
    %v858 = vsel %vm209, %v856, 0.0
    %859 = vadd.xlane.f32.xlu0 %v858
    %v860 = vpop.xlane.xlu0 %859
    %v861 = vsel %vm209, %v857, 0.0
    %862 = vadd.xlane.f32.xlu0 %v861
    %v863 = vpop.xlane.xlu0 %862
    %v864 = vmul.f32 %v860, 0.03125
    %v865 = vmul.f32 %v863, 0.03125
    %v866 = vmul.f32 %v854, %v854
    %v867 = vmul.f32 %v855, %v855
    %v868 = vsub.f32 %v864, %v866
    %v869 = vsub.f32 %v865, %v867
    %v870 = vsub.f32 %v846, %v854
    %v871 = vsub.f32 %v847, %v855
    %v872 = vadd.f32 %v868, 1e-05
    %v873 = vadd.f32 %v869, 1e-05
    %v874 = vrsqrt.pop %v872
    %v875 = vrsqrt.pop %v873
    %v876 = vmul.f32 %v870, %v874
    %v877 = vmul.f32 %v871, %v875
    %v878 = vlaneseq
    %v879 = vshrl.u32 %v878, 7
    %v880 = vsub.s32 0, %v879
    %v881 = vrot.slane %v35, %v880
    %v882 = vmul.f32 %v876, %v881
    %v883 = vmul.f32 %v877, %v881
    %885 = vrot.lane.b32.xlu0 %v881, 96
    %v886 = vpop.permute.xlu0 %885
    %v888 = vadd.f32 %v882, %v886
    %v889 = vadd.f32 %v883, %v886
    %894 = vrot.lane.b32.xlu0 %v29, 96
    %v895 = vpop.permute.xlu0 %894
    %896 = vrot.lane.b32.xlu0 %v30, 96
    %v897 = vpop.permute.xlu0 %896
    %898 = vrot.lane.b32.xlu0 %v31, 96
    %v899 = vpop.permute.xlu0 %898
    %900 = vrot.lane.b32.xlu0 %v32, 96
    %v901 = vpop.permute.xlu0 %900
    %907 = vrot.lane.b32.xlu0 %v764, 96
    %v908 = vpop.permute.xlu0 %907
    %v911 = vsel %vm209, %v888, 0
    %v914 = vsel %vm209, %v889, 0
    %916 = vmatprep.subr.mxu0 0.0
    %917 = vmatpush1.msra.mxu0 %v895
    %918 = vmatprep.subr.mxu0 0.0
    %919 = vmatpush1.msra.mxu0 %v897
    %920 = vmatprep.subr.mxu0 0.0
    %921 = vmatpush1.msra.mxu0 %v899
    %922 = vmatprep.subr.mxu0 0.0
    %923 = vmatpush1.msra.mxu0 %v901
    %924 = vmatprep.subr.mxu0 0.0
    %925 = vmatpush1.msra.mxu0 0.0
    %926 = vmatprep.subr.mxu0 0.0
    %927 = vmatpush1.msra.mxu0 0.0
    %928 = vmatprep.subr.mxu0 0.0
    %929 = vmatpush1.msra.mxu0 0.0
    %930 = vmatprep.subr.mxu0 0.0
    %931 = vmatpush1.msra.mxu0 0.0
    %932 = vmatprep.subr.mxu0 0.0
    %933 = vmatpush1.msra.mxu0 0.0
    %934 = vmatprep.subr.mxu0 0.0
    %935 = vmatpush1.msra.mxu0 0.0
    %936 = vmatprep.subr.mxu0 0.0
    %937 = vmatpush1.msra.mxu0 0.0
    %938 = vmatprep.subr.mxu0 0.0
    %939 = vmatpush1.msra.mxu0 0.0
    %940 = vmatprep.subr.mxu0 0.0
    %941 = vmatpush1.msra.mxu0 0.0
    %942 = vmatprep.subr.mxu0 0.0
    %943 = vmatpush1.msra.mxu0 0.0
    %944 = vmatprep.subr.mxu0 0.0
    %945 = vmatpush1.msra.mxu0 0.0
    %946 = vmatprep.subr.mxu0 0.0
    %947 = vmatpush1.msra.mxu0 0.0
    %948 = vmatprep.subr.mxu0 0.0
    %949 = vmatpush1.msra.mxu0 0.0
    %950 = vmatprep.subr.mxu0 0.0
    %951 = vmatpush1.msra.mxu0 0.0
    %952 = vmatprep.subr.mxu0 0.0
    %953 = vmatpush1.msra.mxu0 0.0
    %954 = vmatprep.subr.mxu0 0.0
    %955 = vmatpush1.msra.mxu0 0.0
    %956 = vmatprep.subr.mxu0 0.0
    %957 = vmatpush1.msra.mxu0 0.0
    %958 = vmatprep.subr.mxu0 0.0
    %959 = vmatpush1.msra.mxu0 0.0
    %960 = vmatprep.subr.mxu0 0.0
    %961 = vmatpush1.msra.mxu0 0.0
    %962 = vmatprep.subr.mxu0 0.0
    %963 = vmatpush1.msra.mxu0 0.0
    %964 = vmatprep.subr.mxu0 0.0
    %965 = vmatpush1.msra.mxu0 0.0
    %966 = vmatprep.subr.mxu0 0.0
    %967 = vmatpush1.msra.mxu0 0.0
    %968 = vmatprep.subr.mxu0 0.0
    %969 = vmatpush1.msra.mxu0 0.0
    %970 = vmatprep.subr.mxu0 0.0
    %971 = vmatpush1.msra.mxu0 0.0
    %972 = vmatprep.subr.mxu0 0.0
    %973 = vmatpush1.msra.mxu0 0.0
    %974 = vmatprep.subr.mxu0 0.0
    %975 = vmatpush1.msra.mxu0 0.0
    %976 = vmatprep.subr.mxu0 0.0
    %977 = vmatpush1.msra.mxu0 0.0
    %978 = vmatprep.subr.mxu0 0.0
    %979 = vmatpush1.msra.mxu0 0.0
    %980 = vmatprep.mubr.f32.mxu0 0.0
    %981 = vmatmul.mubr.f32.gmra.mrb[0].mxu0 %v911
    %v982 = vpop.f32.mrb[0].mxu0
    %v983 = vadd.f32 %v908, %v982
    %v984 = vpop.f32.mrb[0].mxu0
    %985 = vmatprep.mubr.f32.mxu0 0.0
    %986 = vmatmul.mubr.f32.gmra.mrb[0].mxu0 %v914
    %v987 = vpop.f32.mrb[0].mxu0
    %v988 = vadd.f32 %v908, %v987
    %v989 = vpop.f32.mrb[0].mxu0
    %990 = vdwg.mxu0
    %v991 = vmax.f32 %v983, 0.0
    %v992 = vmax.f32 %v988, 0.0
    %993 = vrot.lane.b32.xlu0 %v29, 64
    %v994 = vpop.permute.xlu0 %993
    %995 = vrot.lane.b32.xlu0 %v30, 64
    %v996 = vpop.permute.xlu0 %995
    %997 = vrot.lane.b32.xlu0 %v31, 64
    %v998 = vpop.permute.xlu0 %997
    %999 = vrot.lane.b32.xlu0 %v32, 64
    %v1000 = vpop.permute.xlu0 %999
    %1005 = vrot.lane.b32.xlu0 %v764, 64
    %v1006 = vpop.permute.xlu0 %1005
    %v1009 = vsel %vm209, %v991, 0
    %v1012 = vsel %vm209, %v992, 0
    %1014 = vmatprep.subr.mxu0 0.0
    %1015 = vmatpush1.msra.mxu0 %v994
    %1016 = vmatprep.subr.mxu0 0.0
    %1017 = vmatpush1.msra.mxu0 %v996
    %1018 = vmatprep.subr.mxu0 0.0
    %1019 = vmatpush1.msra.mxu0 %v998
    %1020 = vmatprep.subr.mxu0 0.0
    %1021 = vmatpush1.msra.mxu0 %v1000
    %1022 = vmatprep.subr.mxu0 0.0
    %1023 = vmatpush1.msra.mxu0 0.0
    %1024 = vmatprep.subr.mxu0 0.0
    %1025 = vmatpush1.msra.mxu0 0.0
    %1026 = vmatprep.subr.mxu0 0.0
    %1027 = vmatpush1.msra.mxu0 0.0
    %1028 = vmatprep.subr.mxu0 0.0
    %1029 = vmatpush1.msra.mxu0 0.0
    %1030 = vmatprep.subr.mxu0 0.0
    %1031 = vmatpush1.msra.mxu0 0.0
    %1032 = vmatprep.subr.mxu0 0.0
    %1033 = vmatpush1.msra.mxu0 0.0
    %1034 = vmatprep.subr.mxu0 0.0
    %1035 = vmatpush1.msra.mxu0 0.0
    %1036 = vmatprep.subr.mxu0 0.0
    %1037 = vmatpush1.msra.mxu0 0.0
    %1038 = vmatprep.subr.mxu0 0.0
    %1039 = vmatpush1.msra.mxu0 0.0
    %1040 = vmatprep.subr.mxu0 0.0
    %1041 = vmatpush1.msra.mxu0 0.0
    %1042 = vmatprep.subr.mxu0 0.0
    %1043 = vmatpush1.msra.mxu0 0.0
    %1044 = vmatprep.subr.mxu0 0.0
    %1045 = vmatpush1.msra.mxu0 0.0
    %1046 = vmatprep.subr.mxu0 0.0
    %1047 = vmatpush1.msra.mxu0 0.0
    %1048 = vmatprep.subr.mxu0 0.0
    %1049 = vmatpush1.msra.mxu0 0.0
    %1050 = vmatprep.subr.mxu0 0.0
    %1051 = vmatpush1.msra.mxu0 0.0
    %1052 = vmatprep.subr.mxu0 0.0
    %1053 = vmatpush1.msra.mxu0 0.0
    %1054 = vmatprep.subr.mxu0 0.0
    %1055 = vmatpush1.msra.mxu0 0.0
    %1056 = vmatprep.subr.mxu0 0.0
    %1057 = vmatpush1.msra.mxu0 0.0
    %1058 = vmatprep.subr.mxu0 0.0
    %1059 = vmatpush1.msra.mxu0 0.0
    %1060 = vmatprep.subr.mxu0 0.0
    %1061 = vmatpush1.msra.mxu0 0.0
    %1062 = vmatprep.subr.mxu0 0.0
    %1063 = vmatpush1.msra.mxu0 0.0
    %1064 = vmatprep.subr.mxu0 0.0
    %1065 = vmatpush1.msra.mxu0 0.0
    %1066 = vmatprep.subr.mxu0 0.0
    %1067 = vmatpush1.msra.mxu0 0.0
    %1068 = vmatprep.subr.mxu0 0.0
    %1069 = vmatpush1.msra.mxu0 0.0
    %1070 = vmatprep.subr.mxu0 0.0
    %1071 = vmatpush1.msra.mxu0 0.0
    %1072 = vmatprep.subr.mxu0 0.0
    %1073 = vmatpush1.msra.mxu0 0.0
    %1074 = vmatprep.subr.mxu0 0.0
    %1075 = vmatpush1.msra.mxu0 0.0
    %1076 = vmatprep.subr.mxu0 0.0
    %1077 = vmatpush1.msra.mxu0 0.0
    %1078 = vmatprep.mubr.f32.mxu0 0.0
    %1079 = vmatmul.mubr.f32.gmra.mrb[0].mxu0 %v1009
    %v1080 = vpop.f32.mrb[0].mxu0
    %v1081 = vadd.f32 %v1006, %v1080
    %v1082 = vpop.f32.mrb[0].mxu0
    %1083 = vmatprep.mubr.f32.mxu0 0.0
    %1084 = vmatmul.mubr.f32.gmra.mrb[0].mxu0 %v1012
    %v1085 = vpop.f32.mrb[0].mxu0
    %v1086 = vadd.f32 %v1006, %v1085
    %v1087 = vpop.f32.mrb[0].mxu0
    %1088 = vdwg.mxu0
    %v1089 = vadd.f32 %v1081, %v888
    %v1090 = vadd.f32 %v1086, %v889
    %v1091 = vsel %vm209, %v1089, 0.0
    %1092 = vadd.xlane.f32.xlu0 %v1091
    %v1093 = vpop.xlane.xlu0 %1092
    %v1094 = vsel %vm209, %v1090, 0.0
    %1095 = vadd.xlane.f32.xlu0 %v1094
    %v1096 = vpop.xlane.xlu0 %1095
    %v1097 = vmul.f32 %v1093, 0.03125
    %v1098 = vmul.f32 %v1096, 0.03125
    %v1099 = vmul.f32 %v1089, %v1089
    %v1100 = vmul.f32 %v1090, %v1090
    %v1101 = vsel %vm209, %v1099, 0.0
    %1102 = vadd.xlane.f32.xlu0 %v1101
    %v1103 = vpop.xlane.xlu0 %1102
    %v1104 = vsel %vm209, %v1100, 0.0
    %1105 = vadd.xlane.f32.xlu0 %v1104
    %v1106 = vpop.xlane.xlu0 %1105
    %v1107 = vmul.f32 %v1103, 0.03125
    %v1108 = vmul.f32 %v1106, 0.03125
    %v1109 = vmul.f32 %v1097, %v1097
    %v1110 = vmul.f32 %v1098, %v1098
    %v1111 = vsub.f32 %v1107, %v1109
    %v1112 = vsub.f32 %v1108, %v1110
    %v1113 = vsub.f32 %v1089, %v1097
    %v1114 = vsub.f32 %v1090, %v1098
    %v1115 = vadd.f32 %v1111, 1e-05
    %v1116 = vadd.f32 %v1112, 1e-05
    %v1117 = vrsqrt.pop %v1115
    %v1118 = vrsqrt.pop %v1116
    %v1119 = vmul.f32 %v1113, %v1117
    %v1120 = vmul.f32 %v1114, %v1118
    %1121 = vrot.lane.b32.xlu0 %v881, 64
    %v1122 = vpop.permute.xlu0 %1121
    %v1124 = vmul.f32 %v1119, %v1122
    %v1125 = vmul.f32 %v1120, %v1122
    %v1126 = vlaneseq
    %v1127 = vshrl.u32 %v1126, 7
    %v1128 = vsub.s32 0, %v1127
    %v1129 = vrot.slane %v36, %v1128
    %v1130 = vadd.f32 %v1124, %v1129
    %v1131 = vadd.f32 %v1125, %v1129
    %1133 = vrot.lane.b32.xlu0 %v1129, 96
    %v1134 = vpop.permute.xlu0 %1133
    %v1136 = vmul.f32 %v1130, %v1134
    %v1137 = vmul.f32 %v1131, %v1134
    %v1138 = vsel %vm209, %v1136, 0.0
    %1139 = vadd.xlane.f32.xlu0 %v1138
    %v1140 = vpop.xlane.xlu0 %1139
    %v1141 = vsel %vm209, %v1137, 0.0
    %1142 = vadd.xlane.f32.xlu0 %v1141
    %v1143 = vpop.xlane.xlu0 %1142
    %v1144 = vadd.f32 %v1140, %v1129
    %v1145 = vadd.f32 %v1143, %v1129
    %1148 = vrot.lane.b32.xlu0 %v1144, 64
    %v1149 = vpop.permute.xlu0 %1148
    %1150 = vrot.lane.b32.xlu0 %v1145, 64
    %v1151 = vpop.permute.xlu0 %1150
    %vm1154 = vcmask 7168
    %1155 = vst.msk [vmem:[%s2] sm:$0xff] %vm1154, %v1149
    %1156 = vst.msk [vmem:[%s2 + $0x8] sm:$0xff] %vm1154, %v1151
    // Predicated region
    $region14: #{sakt_forward_pallas.1} parent=1 // pred_check
      _
    $region15: #{sakt_forward_pallas.1} parent=1 // pred_check_branch
      %1158 = sbr.rel (0) target = $region17
    $region16: #{sakt_forward_pallas.1} parent=1 // pred_region
      _
    $region17: #{sakt_forward_pallas.1} parent=1 // pred_fallthru
      _
    // Predicated region
    $region18: #{sakt_forward_pallas.1} parent=1 // pred_check
      _
    $region19: #{sakt_forward_pallas.1} parent=1 // pred_check_branch
      %1160 = sbr.rel (0) target = $region21
    $region20: #{sakt_forward_pallas.1} parent=1 // pred_region
      _
    $region21: #{sakt_forward_pallas.1} parent=1 // pred_fallthru
      _
    %1161 = vsyncpa [#allocation3], 1

</llo_original>
